<compile_context>
chip_gen: v7x
topology: tpu7x:2x2x1
jax: 0.10.0
libtpu: 0.0.40
codegen_flags: <defaults>
</compile_context>

<pallas_src>
import functools

import jax
import jax.numpy as jnp
from jax.experimental import pallas as pl
from jax.experimental.pallas import tpu as pltpu


BN_EPS = 1e-5
LEAKY_SLOPE = 0.01
VMEM_CAP_BYTES = 56 * 1024 * 1024   # conservative per-TC scoped-VMEM cap (v7x: 64 MiB)


def _round_up(x, m):
    return (x + m - 1) // m * m


# ----------------------------------------------------------------------------
# Fused Pallas kernel
# ----------------------------------------------------------------------------
def _fused_mlp_kernel(*refs, num_blocks, emit_emb):
    """Fused simpleMLP forward for one batch tile.

    refs = (x, [w_i, b_i] * num_blocks, w_out, b_out, out[, emb])
    BN is already folded into (w_i, b_i) on the host.  Matmuls run in bf16 with
    f32 accumulation (native MXU path); bias/activation math stays in f32.
    """
    x_ref = refs[0]
    if emit_emb:
        out_ref, emb_ref = refs[-2], refs[-1]
    else:
        out_ref = refs[-1]

    h = x_ref[...].astype(jnp.bfloat16)                 # no-op if already bf16
    idx = 1
    y = None
    for _ in range(num_blocks):                         # unrolled: T is small
        w_ref, b_ref = refs[idx], refs[idx + 1]
        idx += 2
        y = jnp.dot(h, w_ref[...],
                    preferred_element_type=jnp.float32) + b_ref[...]
        y = jnp.maximum(y, LEAKY_SLOPE * y)             # LeakyReLU: vmul + vmax
        h = y.astype(jnp.bfloat16)                      # bf16 for next MXU pass

    w_out_ref, b_out_ref = refs[idx], refs[idx + 1]
    if emit_emb:
        emb_ref[...] = y                                # f32 embedding (last=True)
    out_ref[...] = jnp.dot(h, w_out_ref[...],
                           preferred_element_type=jnp.float32) + b_out_ref[...]


def _resident_spec(shape):
    # constant block index (0,0): never refetched -> single-buffered, VMEM-resident
    return pl.BlockSpec(shape, lambda i: (0, 0), pipeline_mode=pl.Buffered(1))


# ----------------------------------------------------------------------------
# One-time host-side parameter prep (fold BN, pad, cast)
# ----------------------------------------------------------------------------
def prepare_params(params):
    """Fold BatchNorm1d (inference stats) into the preceding Linear, zero-pad
    every operand to (*,128)-aligned tiles and cast matmul weights to bf16.
    Run ONCE per parameter set (hoisted out of the forward call)."""
    layers = params["layers"]
    num_blocks = len(layers)
    assert num_blocks >= 1, "simpleMLP always has at least one MLPBlock"

    D = layers[0]["w"].shape[0]
    W = layers[0]["w"].shape[1]
    O = params["out_w"].shape[1]
    D_pad, W_pad, O_pad = _round_up(D, 128), _round_up(W, 128), _round_up(O, 128)

    weights = []
    in_dim, in_pad = D, D_pad
    for layer in layers:
        scale = layer["gamma"] * jax.lax.rsqrt(layer["var"] + BN_EPS)    # (1,W)
        w_f = layer["w"] * scale                                         # (in,W)
        b_f = (layer["b"] - layer["mean"]) * scale + layer["beta"]       # (1,W)
        w_p = jnp.zeros((in_pad, W_pad), jnp.float32).at[:in_dim, :W].set(w_f)
        b_p = jnp.zeros((1, W_pad), jnp.float32).at[:, :W].set(b_f)
        weights.append(w_p.astype(jnp.bfloat16))
        weights.append(b_p)                                              # f32
        in_dim, in_pad = W, W_pad

    w_out_p = jnp.zeros((W_pad, O_pad), jnp.float32).at[:W, :O].set(params["out_w"])
    b_out_p = jnp.zeros((1, O_pad), jnp.float32).at[:, :O].set(params["out_b"])
    weights.append(w_out_p.astype(jnp.bfloat16))
    weights.append(b_out_p)

    return dict(weights=tuple(weights), dims=(D, W, O),
                pads=(D_pad, W_pad, O_pad), num_blocks=num_blocks)


# ----------------------------------------------------------------------------
# Forward wrapper: pick batch tile, build grid, call the fused kernel
# ----------------------------------------------------------------------------
def simple_mlp_forward(x_nchw, prep, last=False, tile_b=None):
    B = x_nchw.shape[0]
    x = x_nchw.reshape(B, -1)                            # x.view(B, -1)
    D, W, O = prep["dims"]
    D_pad, W_pad, O_pad = prep["pads"]
    num_blocks = prep["num_blocks"]
    assert x.shape[1] == D, "input feature dim mismatch with prepared params"

    if tile_b is None:
        tile_b = 512                                     # 256-multiple: fills wide MXU
        # keep the double-buffered x tile within ~8 MiB of VMEM for very wide inputs
        row_budget = (8 * 1024 * 1024) // max(1, 2 * 4 * D_pad)
        tile_b = min(tile_b, max(16, (row_budget // 16) * 16))
        if B < tile_b:
            tile_b = _round_up(B, 16)                    # bf16 tiles fill (16,128) vregs
    tile_b = max(16, (tile_b // 16) * 16)
    B_pad = _round_up(B, tile_b)

    # x input: avoid pad/cast round-trips.  Tile-aligned -> feed through untouched
    # (cast to bf16 in-kernel, fewest HBM bytes).  Otherwise pad straight into a
    # single bf16 buffer (one fused pad+cast, no f32 intermediate round-trip).
    if B_pad == B and D_pad == D:
        x_in = x
    else:
        x_in = jnp.zeros((B_pad, D_pad), jnp.bfloat16).at[:B, :D].set(
            x.astype(jnp.bfloat16))

    inputs = [x_in] + list(prep["weights"])

    # specs: tile the batch axis; all weights/biases resident (constant block 0)
    in_specs = [pl.BlockSpec((tile_b, D_pad), lambda i: (i, 0))]
    for layer_idx in range(num_blocks):
        rows = D_pad if layer_idx == 0 else W_pad
        in_specs.append(_resident_spec((rows, W_pad)))
        in_specs.append(_resident_spec((1, W_pad)))
    in_specs.append(_resident_spec((W_pad, O_pad)))
    in_specs.append(_resident_spec((1, O_pad)))

    out_specs = pl.BlockSpec((tile_b, O_pad), lambda i: (i, 0))
    out_shape = jax.ShapeDtypeStruct((B_pad, O_pad), jnp.float32)
    if last:                                             # emb only when requested
        out_specs = (out_specs, pl.BlockSpec((tile_b, W_pad), lambda i: (i, 0)))
        out_shape = (out_shape, jax.ShapeDtypeStruct((B_pad, W_pad), jnp.float32))

    # scoped-VMEM budget from actual buffer counts:
    #   weights 1x (Buffered(1)); x / out / emb tiles 2x (double-buffered);
    #   plus f32 intermediate activations; clamped to the physical per-TC cap.
    weight_bytes = sum(int(a.size) * a.dtype.itemsize for a in prep["weights"])
    x_tile = 2 * tile_b * D_pad * x_in.dtype.itemsize
    out_tile = 2 * tile_b * O_pad * 4
    emb_tile = 2 * tile_b * W_pad * 4 if last else 0
    act_scratch = 4 * tile_b * W_pad * 4
    needed = weight_bytes + x_tile + out_tile + emb_tile + act_scratch
    vmem_limit = int(min(VMEM_CAP_BYTES,
                         max(16 * 1024 * 1024, needed + (2 << 20))))

    result = pl.pallas_call(
        functools.partial(_fused_mlp_kernel, num_blocks=num_blocks,
                          emit_emb=last),
        grid=(B_pad // tile_b,),
        in_specs=in_specs,
        out_specs=out_specs,
        out_shape=out_shape,
        compiler_params=pltpu.CompilerParams(
            dimension_semantics=("parallel",),
            vmem_limit_bytes=vmem_limit),
    )(*inputs)

    if last:
        out_p, emb_p = result
        return out_p[:B, :O], emb_p[:B, :W]
    return result[:B, :O]


# ----------------------------------------------------------------------------
# Deterministic parameter initialization (torch-style)
# ----------------------------------------------------------------------------
def init_params(key, input_feature_dim, out_feature_dim, max_width,
                truncation_level):
    def linear_init(key, fan_in, fan_out):
        kw, kb = jax.random.split(key)
        bound = 1.0 / jnp.sqrt(fan_in)
        # stored as (in, out) = torch (out, in).T
        w = jax.random.uniform(kw, (fan_in, fan_out), jnp.float32, -bound, bound)
        b = jax.random.uniform(kb, (1, fan_out), jnp.float32, -bound, bound)
        return w, b

    keys = jax.random.split(key, truncation_level + 1)
    layers = []
    in_dim = input_feature_dim
    for i in range(truncation_level):
        kw, kbn = jax.random.split(keys[i])
        w, b = linear_init(kw, in_dim, max_width)
        # BatchNorm1d params: deterministic, slightly perturbed running stats.
        kg, kbeta, km, kv = jax.random.split(kbn, 4)
        gamma = 1.0 + 0.1 * jax.random.normal(kg, (1, max_width), jnp.float32)
        beta = 0.1 * jax.random.normal(kbeta, (1, max_width), jnp.float32)
        mean = 0.1 * jax.random.normal(km, (1, max_width), jnp.float32)
        var = 1.0 + 0.1 * jax.random.uniform(kv, (1, max_width), jnp.float32)
        layers.append(dict(w=w, b=b, gamma=gamma, beta=beta, mean=mean, var=var))
        in_dim = max_width

    out_w, out_b = linear_init(keys[-1], max_width, out_feature_dim)
    return dict(layers=layers, out_w=out_w, out_b=out_b)


# ----------------------------------------------------------------------------
# Pure-JAX f32 reference for validation
# ----------------------------------------------------------------------------
def reference_forward(x_nchw, params):
    B = x_nchw.shape[0]
    x = x_nchw.reshape(B, -1).astype(jnp.float32)
    for layer in params["layers"]:
        y = x @ layer["w"] + layer["b"]
        y = (y - layer["mean"]) / jnp.sqrt(layer["var"] + BN_EPS) \
            * layer["gamma"] + layer["beta"]
        x = jnp.where(y >= 0, y, LEAKY_SLOPE * y)
    return x @ params["out_w"] + params["out_b"], x


if __name__ == "__main__":
    # small config consistent with the module
    B, C, H, W = 2, 4, 16, 16
    input_feature_dim = C * H * W          # 1024 (flattened NCHW)
    out_feature_dim = 8
    max_width = 32                         # args.max_width
    truncation_level = 3                   # args.truncation_level

    key = jax.random.PRNGKey(0)
    kx, kp = jax.random.split(key)
    x = jax.random.normal(kx, (B, C, H, W), jnp.float32)
    params = init_params(kp, input_feature_dim, out_feature_dim, max_width,
                         truncation_level)
    prep = prepare_params(params)          # BN fold / pad / bf16 cast: once

    out, emb = simple_mlp_forward(x, prep, last=True)
    out = jax.block_until_ready(out)
    emb = jax.block_until_ready(emb)

    out_only = jax.block_until_ready(simple_mlp_forward(x, prep, last=False))

    ref_out, ref_emb = reference_forward(x, params)
    assert out.shape == (B, out_feature_dim)
    assert emb.shape == (B, max_width)
    assert out_only.shape == (B, out_feature_dim)
    # bf16 matmul path -> relaxed tolerance vs f32 reference
    assert jnp.allclose(out, ref_out, atol=2e-2, rtol=2e-2), "out mismatch"
    assert jnp.allclose(emb, ref_emb, atol=2e-2, rtol=2e-2), "emb mismatch"
    assert jnp.allclose(out_only, ref_out, atol=2e-2, rtol=2e-2), \
        "out (last=False) mismatch"

    print("KERNEL_OK")
</pallas_src>

<mosaic_0001>
module attributes {stable_mosaic.version = 11 : i64} {
  func.func @_fused_mlp_kernel(%arg0: i32, %arg1: memref<16x1024xbf16, #tpu.memory_space<vmem>>, %arg2: memref<1024x128xbf16, #tpu.memory_space<vmem>>, %arg3: memref<1x128xf32, #tpu.memory_space<vmem>>, %arg4: memref<128x128xbf16, #tpu.memory_space<vmem>>, %arg5: memref<1x128xf32, #tpu.memory_space<vmem>>, %arg6: memref<128x128xbf16, #tpu.memory_space<vmem>>, %arg7: memref<1x128xf32, #tpu.memory_space<vmem>>, %arg8: memref<128x128xbf16, #tpu.memory_space<vmem>>, %arg9: memref<1x128xf32, #tpu.memory_space<vmem>>, %arg10: memref<16x128xf32, #tpu.memory_space<vmem>>, %arg11: memref<16x128xf32, #tpu.memory_space<vmem>>) attributes {dimension_semantics = [#tpu.dimension_semantics<parallel>], iteration_bounds = array<i64: 1>, scalar_prefetch = 0 : i64, scratch_operands = 0 : i64, tpu.core_type = #tpu.core_type<tc>, window_params = [{transform_indices = @transform_0, window_bounds = array<i64: 16, 1024>}, {pipeline_mode = #tpu.pipeline_mode<synchronous>, transform_indices = @transform_1, window_bounds = array<i64: 1024, 128>}, {pipeline_mode = #tpu.pipeline_mode<synchronous>, transform_indices = @transform_2, window_bounds = array<i64: 1, 128>}, {pipeline_mode = #tpu.pipeline_mode<synchronous>, transform_indices = @transform_3, window_bounds = array<i64: 128, 128>}, {pipeline_mode = #tpu.pipeline_mode<synchronous>, transform_indices = @transform_4, window_bounds = array<i64: 1, 128>}, {pipeline_mode = #tpu.pipeline_mode<synchronous>, transform_indices = @transform_5, window_bounds = array<i64: 128, 128>}, {pipeline_mode = #tpu.pipeline_mode<synchronous>, transform_indices = @transform_6, window_bounds = array<i64: 1, 128>}, {pipeline_mode = #tpu.pipeline_mode<synchronous>, transform_indices = @transform_7, window_bounds = array<i64: 128, 128>}, {pipeline_mode = #tpu.pipeline_mode<synchronous>, transform_indices = @transform_8, window_bounds = array<i64: 1, 128>}, {transform_indices = @transform_9, window_bounds = array<i64: 16, 128>}, {transform_indices = @transform_10, window_bounds = array<i64: 16, 128>}]} {
    %c0 = arith.constant 0 : index
    %c0_0 = arith.constant 0 : index
    %0 = vector.load %arg1[%c0, %c0_0] : memref<16x1024xbf16, #tpu.memory_space<vmem>>, vector<16x1024xbf16>
    %c0_1 = arith.constant 0 : index
    %c0_2 = arith.constant 0 : index
    %1 = vector.load %arg2[%c0_1, %c0_2] : memref<1024x128xbf16, #tpu.memory_space<vmem>>, vector<1024x128xbf16>
    %cst = arith.constant dense<0.000000e+00> : vector<16x128xf32>
    %2 = tpu.matmul %0, %1, %cst {dimension_numbers = #tpu.dot_dimension_numbers<[1], [0], [0], [1], [0, 0, 1, 1], [], []>} : vector<16x1024xbf16>, vector<1024x128xbf16>, vector<16x128xf32> -> vector<16x128xf32>
    %c0_3 = arith.constant 0 : index
    %c0_4 = arith.constant 0 : index
    %3 = vector.load %arg3[%c0_3, %c0_4] : memref<1x128xf32, #tpu.memory_space<vmem>>, vector<1x128xf32>
    %4 = vector.broadcast %3 : vector<1x128xf32> to vector<16x128xf32>
    %5 = arith.addf %2, %4 : vector<16x128xf32>
    %cst_5 = arith.constant 0.00999999977 : f32
    %6 = vector.broadcast %cst_5 : f32 to vector<16x128xf32>
    %7 = arith.mulf %6, %5 : vector<16x128xf32>
    %8 = arith.maximumf %5, %7 : vector<16x128xf32>
    %9 = arith.truncf %8 : vector<16x128xf32> to vector<16x128xbf16>
    %c0_6 = arith.constant 0 : index
    %c0_7 = arith.constant 0 : index
    %10 = vector.load %arg4[%c0_6, %c0_7] : memref<128x128xbf16, #tpu.memory_space<vmem>>, vector<128x128xbf16>
    %cst_8 = arith.constant dense<0.000000e+00> : vector<16x128xf32>
    %11 = tpu.matmul %9, %10, %cst_8 {dimension_numbers = #tpu.dot_dimension_numbers<[1], [0], [0], [1], [0, 0, 1, 1], [], []>} : vector<16x128xbf16>, vector<128x128xbf16>, vector<16x128xf32> -> vector<16x128xf32>
    %c0_9 = arith.constant 0 : index
    %c0_10 = arith.constant 0 : index
    %12 = vector.load %arg5[%c0_9, %c0_10] : memref<1x128xf32, #tpu.memory_space<vmem>>, vector<1x128xf32>
    %13 = vector.broadcast %12 : vector<1x128xf32> to vector<16x128xf32>
    %14 = arith.addf %11, %13 : vector<16x128xf32>
    %cst_11 = arith.constant 0.00999999977 : f32
    %15 = vector.broadcast %cst_11 : f32 to vector<16x128xf32>
    %16 = arith.mulf %15, %14 : vector<16x128xf32>
    %17 = arith.maximumf %14, %16 : vector<16x128xf32>
    %18 = arith.truncf %17 : vector<16x128xf32> to vector<16x128xbf16>
    %c0_12 = arith.constant 0 : index
    %c0_13 = arith.constant 0 : index
    %19 = vector.load %arg6[%c0_12, %c0_13] : memref<128x128xbf16, #tpu.memory_space<vmem>>, vector<128x128xbf16>
    %cst_14 = arith.constant dense<0.000000e+00> : vector<16x128xf32>
    %20 = tpu.matmul %18, %19, %cst_14 {dimension_numbers = #tpu.dot_dimension_numbers<[1], [0], [0], [1], [0, 0, 1, 1], [], []>} : vector<16x128xbf16>, vector<128x128xbf16>, vector<16x128xf32> -> vector<16x128xf32>
    %c0_15 = arith.constant 0 : index
    %c0_16 = arith.constant 0 : index
    %21 = vector.load %arg7[%c0_15, %c0_16] : memref<1x128xf32, #tpu.memory_space<vmem>>, vector<1x128xf32>
    %22 = vector.broadcast %21 : vector<1x128xf32> to vector<16x128xf32>
    %23 = arith.addf %20, %22 : vector<16x128xf32>
    %cst_17 = arith.constant 0.00999999977 : f32
    %24 = vector.broadcast %cst_17 : f32 to vector<16x128xf32>
    %25 = arith.mulf %24, %23 : vector<16x128xf32>
    %26 = arith.maximumf %23, %25 : vector<16x128xf32>
    %27 = arith.truncf %26 : vector<16x128xf32> to vector<16x128xbf16>
    %c0_18 = arith.constant 0 : index
    %c0_19 = arith.constant 0 : index
    %28 = vector.load %arg11[%c0_18, %c0_19] : memref<16x128xf32, #tpu.memory_space<vmem>>, vector<16x128xf32>
    tpu.vector_store %arg11[%c0_18, %c0_19], %26 {strides = array<i32>} : memref<16x128xf32, #tpu.memory_space<vmem>>, vector<16x128xf32>,
    %c0_20 = arith.constant 0 : index
    %c0_21 = arith.constant 0 : index
    %29 = vector.load %arg8[%c0_20, %c0_21] : memref<128x128xbf16, #tpu.memory_space<vmem>>, vector<128x128xbf16>
    %cst_22 = arith.constant dense<0.000000e+00> : vector<16x128xf32>
    %30 = tpu.matmul %27, %29, %cst_22 {dimension_numbers = #tpu.dot_dimension_numbers<[1], [0], [0], [1], [0, 0, 1, 1], [], []>} : vector<16x128xbf16>, vector<128x128xbf16>, vector<16x128xf32> -> vector<16x128xf32>
    %c0_23 = arith.constant 0 : index
    %c0_24 = arith.constant 0 : index
    %31 = vector.load %arg9[%c0_23, %c0_24] : memref<1x128xf32, #tpu.memory_space<vmem>>, vector<1x128xf32>
    %32 = vector.broadcast %31 : vector<1x128xf32> to vector<16x128xf32>
    %33 = arith.addf %30, %32 : vector<16x128xf32>
    %c0_25 = arith.constant 0 : index
    %c0_26 = arith.constant 0 : index
    %34 = vector.load %arg10[%c0_25, %c0_26] : memref<16x128xf32, #tpu.memory_space<vmem>>, vector<16x128xf32>
    tpu.vector_store %arg10[%c0_25, %c0_26], %33 {strides = array<i32>} : memref<16x128xf32, #tpu.memory_space<vmem>>, vector<16x128xf32>,
    return
  }
  func.func @transform_0(%arg0: i32) -> (i32, i32) {
    %c0_i32 = arith.constant 0 : i32
    %c0_i32_0 = arith.constant 0 : i32
    return %arg0, %c0_i32 : i32, i32
  }
  func.func @transform_1(%arg0: i32) -> (i32, i32) {
    %c0_i32 = arith.constant 0 : i32
    %c0_i32_0 = arith.constant 0 : i32
    %c0_i32_1 = arith.constant 0 : i32
    return %c0_i32, %c0_i32_0 : i32, i32
  }
  func.func @transform_2(%arg0: i32) -> (i32, i32) {
    %c0_i32 = arith.constant 0 : i32
    %c0_i32_0 = arith.constant 0 : i32
    %c0_i32_1 = arith.constant 0 : i32
    return %c0_i32, %c0_i32_0 : i32, i32
  }
  func.func @transform_3(%arg0: i32) -> (i32, i32) {
    %c0_i32 = arith.constant 0 : i32
    %c0_i32_0 = arith.constant 0 : i32
    %c0_i32_1 = arith.constant 0 : i32
    return %c0_i32, %c0_i32_0 : i32, i32
  }
  func.func @transform_4(%arg0: i32) -> (i32, i32) {
    %c0_i32 = arith.constant 0 : i32
    %c0_i32_0 = arith.constant 0 : i32
    %c0_i32_1 = arith.constant 0 : i32
    return %c0_i32, %c0_i32_0 : i32, i32
  }
  func.func @transform_5(%arg0: i32) -> (i32, i32) {
    %c0_i32 = arith.constant 0 : i32
    %c0_i32_0 = arith.constant 0 : i32
    %c0_i32_1 = arith.constant 0 : i32
    return %c0_i32, %c0_i32_0 : i32, i32
  }
  func.func @transform_6(%arg0: i32) -> (i32, i32) {
    %c0_i32 = arith.constant 0 : i32
    %c0_i32_0 = arith.constant 0 : i32
    %c0_i32_1 = arith.constant 0 : i32
    return %c0_i32, %c0_i32_0 : i32, i32
  }
  func.func @transform_7(%arg0: i32) -> (i32, i32) {
    %c0_i32 = arith.constant 0 : i32
    %c0_i32_0 = arith.constant 0 : i32
    %c0_i32_1 = arith.constant 0 : i32
    return %c0_i32, %c0_i32_0 : i32, i32
  }
  func.func @transform_8(%arg0: i32) -> (i32, i32) {
    %c0_i32 = arith.constant 0 : i32
    %c0_i32_0 = arith.constant 0 : i32
    %c0_i32_1 = arith.constant 0 : i32
    return %c0_i32, %c0_i32_0 : i32, i32
  }
  func.func @transform_9(%arg0: i32) -> (i32, i32) {
    %c0_i32 = arith.constant 0 : i32
    %c0_i32_0 = arith.constant 0 : i32
    return %arg0, %c0_i32 : i32, i32
  }
  func.func @transform_10(%arg0: i32) -> (i32, i32) {
    %c0_i32 = arith.constant 0 : i32
    %c0_i32_0 = arith.constant 0 : i32
    return %arg0, %c0_i32 : i32, i32
  }
}

</mosaic_0001>

<llo_original>
// kernel: tpu_custom_call.1
$region0: #{tpu_custom_call.1}
  #allocation0 [shape = 'u32[]', space=smem, size = 0x4, offset = 0x4, fixed_abs, tag = 'smem constant byte address 0x4 - core index']
  #allocation1 [shape = 'u32[144,128]{1,0:T(1,128)}', space=vmem, size = 0x12000, scoped, tag = 'internal scratch']
  %s0 = inlined_call_operand.hbm [shape: bf16[16,1024], index: 0, kind: input, shape index: {}]
  %s1 = inlined_call_operand.hbm [shape: bf16[1024,128], index: 1, kind: input, shape index: {}]
  %s2 = inlined_call_operand.vmem [shape: f32[1,128], index: 2, kind: input, shape index: {}]
  %s3 = inlined_call_operand.hbm [shape: bf16[128,128], index: 3, kind: input, shape index: {}]
  %s4 = inlined_call_operand.vmem [shape: f32[1,128], index: 4, kind: input, shape index: {}]
  %s5 = inlined_call_operand.hbm [shape: bf16[128,128], index: 5, kind: input, shape index: {}]
  %s6 = inlined_call_operand.vmem [shape: f32[1,128], index: 6, kind: input, shape index: {}]
  %s7 = inlined_call_operand.hbm [shape: bf16[128,128], index: 7, kind: input, shape index: {}]
  %s8 = inlined_call_operand.vmem [shape: f32[1,128], index: 8, kind: input, shape index: {}]
  %s9 = inlined_call_operand.hbm [shape: f32[16,128], index: 9, kind: output, shape index: {0}]
  %s10 = inlined_call_operand.hbm [shape: f32[16,128], index: 10, kind: output, shape index: {1}]
  %11 = xla_tuple %s9, %s10
  %s12 = sld [smem:[#allocation0]]
  $region74: #{tpu_custom_call.1} parent=0
    _
  %s14 = ssub.s32 1, %s12
  %s15 = scalar_select 0, %s14, %s12
  $region1: #{tpu_custom_call.1} parent=0
    #allocation2 [shape = 'u8[32768]{0}', space=vmem, size = 0x8000, scoped, tag = 'input window, operand 0, single buffered']
    #allocation3 [shape = 's32[1]{0}', space=sflag, size = 0x4, scoped, tag = 'scoped memory for tpu_custom_call.1']
    #allocation4 [shape = 's32[1]{0}', space=sflag, size = 0x4, scoped, tag = 'scoped memory for tpu_custom_call.1']
    #allocation5 [shape = 'u8[262144]{0}', space=vmem, size = 0x40000, scoped, tag = 'input window, operand 1, single buffered']
    #allocation6 [shape = 's32[1]{0}', space=sflag, size = 0x4, scoped, tag = 'scoped memory for tpu_custom_call.1']
    #allocation7 [shape = 'u8[32768]{0}', space=vmem, size = 0x8000, scoped, tag = 'input window, operand 3, single buffered']
    #allocation8 [shape = 'u8[32768]{0}', space=vmem, size = 0x8000, scoped, tag = 'input window, operand 5, single buffered']
    #allocation9 [shape = 's32[1]{0}', space=sflag, size = 0x4, scoped, tag = 'scoped memory for tpu_custom_call.1']
    #allocation10 [shape = 'u8[32768]{0}', space=vmem, size = 0x8000, scoped, tag = 'input window, operand 7, single buffered']
    #allocation11 [shape = 'u8[8192]{0}', space=vmem, size = 0x2000, scoped, tag = 'output window, operand 0, single buffered']
    #allocation12 [shape = 'u8[8192]{0}', space=vmem, size = 0x2000, scoped, tag = 'output window, operand 1, single buffered']
    #allocation13 [shape = 's32[1]{0}', space=sflag, size = 0x4, scoped, tag = 'scoped memory for tpu_custom_call.1']
    %16 = vsyncpa [#allocation3], 0
    %17 = vsyncpa [#allocation6], 0
    %18 = vsyncpa [#allocation9], 0
    %19 = vsyncpa [#allocation4], 0
    %20 = vsyncpa [#allocation13], 0
    // Predicated region
    $region2: #{tpu_custom_call.1} parent=1 // pred_check
      _
    $region3: #{tpu_custom_call.1} parent=1 // pred_check_branch
      %22 = sbr.rel (0) target = $region5
    $region4: #{tpu_custom_call.1} parent=1 // pred_region
      %s24 = ssub.s32 1024, 1024
      %25 = vsyncadd [#allocation3], %s24
      %s26 = sshll.u32 [#allocation2], 4
      %s27 = int_to_ptr.vmem [resolvable:$true] %s26
      %32 = dma.hbm_to_vmem [thread:$0]  %s0, 1024, %s27, [#allocation3], 512, 512, 32
    $region5: #{tpu_custom_call.1} parent=1 // pred_fallthru
      _
    // Predicated region
    $region6: #{tpu_custom_call.1} parent=1 // pred_check
      _
    $region7: #{tpu_custom_call.1} parent=1 // pred_check_branch
      %34 = sbr.rel (0) target = $region9
    $region8: #{tpu_custom_call.1} parent=1 // pred_region
      %s36 = ssub.s32 8192, 8192
      %37 = vsyncadd [#allocation6], %s36
      %s38 = sshll.u32 [#allocation5], 4
      %s39 = int_to_ptr.vmem [resolvable:$true] %s38
      %44 = dma.hbm_to_vmem [thread:$0]  %s1, 8192, %s39, [#allocation6], 64, 64, 4
    $region9: #{tpu_custom_call.1} parent=1 // pred_fallthru
      _
    // Predicated region
    $region10: #{tpu_custom_call.1} parent=1 // pred_check
      _
    $region11: #{tpu_custom_call.1} parent=1 // pred_check_branch
      %46 = sbr.rel (0) target = $region13
    $region12: #{tpu_custom_call.1} parent=1 // pred_region
      _
    $region13: #{tpu_custom_call.1} parent=1 // pred_fallthru
      _
    // Predicated region
    $region14: #{tpu_custom_call.1} parent=1 // pred_check
      _
    $region15: #{tpu_custom_call.1} parent=1 // pred_check_branch
      %48 = sbr.rel (0) target = $region17
    $region16: #{tpu_custom_call.1} parent=1 // pred_region
      %s50 = ssub.s32 1024, 1024
      %51 = vsyncadd [#allocation6], %s50
      %s52 = sshll.u32 [#allocation7], 4
      %s53 = int_to_ptr.vmem [resolvable:$true] %s52
      %58 = dma.hbm_to_vmem [thread:$0]  %s3, 1024, %s53, [#allocation6], 64, 64, 4
    $region17: #{tpu_custom_call.1} parent=1 // pred_fallthru
      _
    // Predicated region
    $region18: #{tpu_custom_call.1} parent=1 // pred_check
      _
    $region19: #{tpu_custom_call.1} parent=1 // pred_check_branch
      %60 = sbr.rel (0) target = $region21
    $region20: #{tpu_custom_call.1} parent=1 // pred_region
      _
    $region21: #{tpu_custom_call.1} parent=1 // pred_fallthru
      _
    // Predicated region
    $region22: #{tpu_custom_call.1} parent=1 // pred_check
      _
    $region23: #{tpu_custom_call.1} parent=1 // pred_check_branch
      %62 = sbr.rel (0) target = $region25
    $region24: #{tpu_custom_call.1} parent=1 // pred_region
      %s64 = ssub.s32 1024, 1024
      %65 = vsyncadd [#allocation9], %s64
      %s66 = sshll.u32 [#allocation8], 4
      %s67 = int_to_ptr.vmem [resolvable:$true] %s66
      %72 = dma.hbm_to_vmem [thread:$0]  %s5, 1024, %s67, [#allocation9], 64, 64, 4
    $region25: #{tpu_custom_call.1} parent=1 // pred_fallthru
      _
    // Predicated region
    $region26: #{tpu_custom_call.1} parent=1 // pred_check
      _
    $region27: #{tpu_custom_call.1} parent=1 // pred_check_branch
      %74 = sbr.rel (0) target = $region29
    $region28: #{tpu_custom_call.1} parent=1 // pred_region
      _
    $region29: #{tpu_custom_call.1} parent=1 // pred_fallthru
      _
    // Predicated region
    $region30: #{tpu_custom_call.1} parent=1 // pred_check
      _
    $region31: #{tpu_custom_call.1} parent=1 // pred_check_branch
      %76 = sbr.rel (0) target = $region33
    $region32: #{tpu_custom_call.1} parent=1 // pred_region
      %s78 = ssub.s32 1024, 1024
      %79 = vsyncadd [#allocation9], %s78
      %s80 = sshll.u32 [#allocation10], 4
      %s81 = int_to_ptr.vmem [resolvable:$true] %s80
      %86 = dma.hbm_to_vmem [thread:$0]  %s7, 1024, %s81, [#allocation9], 64, 64, 4
    $region33: #{tpu_custom_call.1} parent=1 // pred_fallthru
      _
    // Predicated region
    $region34: #{tpu_custom_call.1} parent=1 // pred_check
      _
    $region35: #{tpu_custom_call.1} parent=1 // pred_check_branch
      %88 = sbr.rel (0) target = $region37
    $region36: #{tpu_custom_call.1} parent=1 // pred_region
      _
    $region37: #{tpu_custom_call.1} parent=1 // pred_fallthru
      _
    // Predicated region
    $region38: #{tpu_custom_call.1} parent=1 // pred_check
      _
    $region39: #{tpu_custom_call.1} parent=1 // pred_check_branch
      %90 = sbr.rel (0) target = $region41
    $region40: #{tpu_custom_call.1} parent=1 // pred_region
      %91 = dma.done [#allocation3], 1024
    $region41: #{tpu_custom_call.1} parent=1 // pred_fallthru
      _
    // Predicated region
    $region42: #{tpu_custom_call.1} parent=1 // pred_check
      _
    $region43: #{tpu_custom_call.1} parent=1 // pred_check_branch
      %93 = sbr.rel (0) target = $region45
    $region44: #{tpu_custom_call.1} parent=1 // pred_region
      %94 = dma.done [#allocation6], 8192
    $region45: #{tpu_custom_call.1} parent=1 // pred_fallthru
      _
    // Predicated region
    $region46: #{tpu_custom_call.1} parent=1 // pred_check
      _
    $region47: #{tpu_custom_call.1} parent=1 // pred_check_branch
      %96 = sbr.rel (0) target = $region49
    $region48: #{tpu_custom_call.1} parent=1 // pred_region
      %97 = dma.done [#allocation6], 1024
    $region49: #{tpu_custom_call.1} parent=1 // pred_fallthru
      _
    // Predicated region
    $region50: #{tpu_custom_call.1} parent=1 // pred_check
      _
    $region51: #{tpu_custom_call.1} parent=1 // pred_check_branch
      %99 = sbr.rel (0) target = $region53
    $region52: #{tpu_custom_call.1} parent=1 // pred_region
      %100 = dma.done [#allocation9], 1024
    $region53: #{tpu_custom_call.1} parent=1 // pred_fallthru
      _
    // Predicated region
    $region54: #{tpu_custom_call.1} parent=1 // pred_check
      _
    $region55: #{tpu_custom_call.1} parent=1 // pred_check_branch
      %102 = sbr.rel (0) target = $region57
    $region56: #{tpu_custom_call.1} parent=1 // pred_region
      %103 = dma.done [#allocation9], 1024
    $region57: #{tpu_custom_call.1} parent=1 // pred_fallthru
      _
    %v105 = vld [vmem:[#allocation2] sm:$0xff]
    %v106 = vld [vmem:[#allocation2 + $0x8] sm:$0xff]
    %v107 = vld [vmem:[#allocation2 + $0x10] sm:$0xff]
    %v108 = vld [vmem:[#allocation2 + $0x18] sm:$0xff]
    %v109 = vld [vmem:[#allocation2 + $0x20] sm:$0xff]
    %v110 = vld [vmem:[#allocation2 + $0x28] sm:$0xff]
    %v111 = vld [vmem:[#allocation2 + $0x30] sm:$0xff]
    %v112 = vld [vmem:[#allocation2 + $0x38] sm:$0xff]
    %v113 = vld [vmem:[#allocation5] sm:$0xf]
    %v114 = vld [vmem:[#allocation5 + $0x4] sm:$0xf]
    %v115 = vld [vmem:[#allocation5 + $0x8] sm:$0xf]
    %v116 = vld [vmem:[#allocation5 + $0xc] sm:$0xf]
    %v117 = vld [vmem:[#allocation5 + $0x10] sm:$0xf]
    %v118 = vld [vmem:[#allocation5 + $0x14] sm:$0xf]
    %v119 = vld [vmem:[#allocation5 + $0x18] sm:$0xf]
    %v120 = vld [vmem:[#allocation5 + $0x1c] sm:$0xf]
    %v121 = vld [vmem:[#allocation5 + $0x20] sm:$0xf]
    %v122 = vld [vmem:[#allocation5 + $0x24] sm:$0xf]
    %v123 = vld [vmem:[#allocation5 + $0x28] sm:$0xf]
    %v124 = vld [vmem:[#allocation5 + $0x2c] sm:$0xf]
    %v125 = vld [vmem:[#allocation5 + $0x30] sm:$0xf]
    %v126 = vld [vmem:[#allocation5 + $0x34] sm:$0xf]
    %v127 = vld [vmem:[#allocation5 + $0x38] sm:$0xf]
    %v128 = vld [vmem:[#allocation5 + $0x3c] sm:$0xf]
    %v129 = vld [vmem:[#allocation5 + $0x40] sm:$0xf]
    %v130 = vld [vmem:[#allocation5 + $0x44] sm:$0xf]
    %v131 = vld [vmem:[#allocation5 + $0x48] sm:$0xf]
    %v132 = vld [vmem:[#allocation5 + $0x4c] sm:$0xf]
    %v133 = vld [vmem:[#allocation5 + $0x50] sm:$0xf]
    %v134 = vld [vmem:[#allocation5 + $0x54] sm:$0xf]
    %v135 = vld [vmem:[#allocation5 + $0x58] sm:$0xf]
    %v136 = vld [vmem:[#allocation5 + $0x5c] sm:$0xf]
    %v137 = vld [vmem:[#allocation5 + $0x60] sm:$0xf]
    %v138 = vld [vmem:[#allocation5 + $0x64] sm:$0xf]
    %v139 = vld [vmem:[#allocation5 + $0x68] sm:$0xf]
    %v140 = vld [vmem:[#allocation5 + $0x6c] sm:$0xf]
    %v141 = vld [vmem:[#allocation5 + $0x70] sm:$0xf]
    %v142 = vld [vmem:[#allocation5 + $0x74] sm:$0xf]
    %v143 = vld [vmem:[#allocation5 + $0x78] sm:$0xf]
    %v144 = vld [vmem:[#allocation5 + $0x7c] sm:$0xf]
    %v145 = vld [vmem:[#allocation5 + $0x80] sm:$0xf]
    %v146 = vld [vmem:[#allocation5 + $0x84] sm:$0xf]
    %v147 = vld [vmem:[#allocation5 + $0x88] sm:$0xf]
    %v148 = vld [vmem:[#allocation5 + $0x8c] sm:$0xf]
    %v149 = vld [vmem:[#allocation5 + $0x90] sm:$0xf]
    %v150 = vld [vmem:[#allocation5 + $0x94] sm:$0xf]
    %v151 = vld [vmem:[#allocation5 + $0x98] sm:$0xf]
    %v152 = vld [vmem:[#allocation5 + $0x9c] sm:$0xf]
    %v153 = vld [vmem:[#allocation5 + $0xa0] sm:$0xf]
    %v154 = vld [vmem:[#allocation5 + $0xa4] sm:$0xf]
    %v155 = vld [vmem:[#allocation5 + $0xa8] sm:$0xf]
    %v156 = vld [vmem:[#allocation5 + $0xac] sm:$0xf]
    %v157 = vld [vmem:[#allocation5 + $0xb0] sm:$0xf]
    %v158 = vld [vmem:[#allocation5 + $0xb4] sm:$0xf]
    %v159 = vld [vmem:[#allocation5 + $0xb8] sm:$0xf]
    %v160 = vld [vmem:[#allocation5 + $0xbc] sm:$0xf]
    %v161 = vld [vmem:[#allocation5 + $0xc0] sm:$0xf]
    %v162 = vld [vmem:[#allocation5 + $0xc4] sm:$0xf]
    %v163 = vld [vmem:[#allocation5 + $0xc8] sm:$0xf]
    %v164 = vld [vmem:[#allocation5 + $0xcc] sm:$0xf]
    %v165 = vld [vmem:[#allocation5 + $0xd0] sm:$0xf]
    %v166 = vld [vmem:[#allocation5 + $0xd4] sm:$0xf]
    %v167 = vld [vmem:[#allocation5 + $0xd8] sm:$0xf]
    %v168 = vld [vmem:[#allocation5 + $0xdc] sm:$0xf]
    %v169 = vld [vmem:[#allocation5 + $0xe0] sm:$0xf]
    %v170 = vld [vmem:[#allocation5 + $0xe4] sm:$0xf]
    %v171 = vld [vmem:[#allocation5 + $0xe8] sm:$0xf]
    %v172 = vld [vmem:[#allocation5 + $0xec] sm:$0xf]
    %v173 = vld [vmem:[#allocation5 + $0xf0] sm:$0xf]
    %v174 = vld [vmem:[#allocation5 + $0xf4] sm:$0xf]
    %v175 = vld [vmem:[#allocation5 + $0xf8] sm:$0xf]
    %v176 = vld [vmem:[#allocation5 + $0xfc] sm:$0xf]
    %v177 = vld [vmem:[#allocation5 + $0x100] sm:$0xf]
    %v178 = vld [vmem:[#allocation5 + $0x104] sm:$0xf]
    %v179 = vld [vmem:[#allocation5 + $0x108] sm:$0xf]
    %v180 = vld [vmem:[#allocation5 + $0x10c] sm:$0xf]
    %v181 = vld [vmem:[#allocation5 + $0x110] sm:$0xf]
    %v182 = vld [vmem:[#allocation5 + $0x114] sm:$0xf]
    %v183 = vld [vmem:[#allocation5 + $0x118] sm:$0xf]
    %v184 = vld [vmem:[#allocation5 + $0x11c] sm:$0xf]
    %v185 = vld [vmem:[#allocation5 + $0x120] sm:$0xf]
    %v186 = vld [vmem:[#allocation5 + $0x124] sm:$0xf]
    %v187 = vld [vmem:[#allocation5 + $0x128] sm:$0xf]
    %v188 = vld [vmem:[#allocation5 + $0x12c] sm:$0xf]
    %v189 = vld [vmem:[#allocation5 + $0x130] sm:$0xf]
    %v190 = vld [vmem:[#allocation5 + $0x134] sm:$0xf]
    %v191 = vld [vmem:[#allocation5 + $0x138] sm:$0xf]
    %v192 = vld [vmem:[#allocation5 + $0x13c] sm:$0xf]
    %v193 = vld [vmem:[#allocation5 + $0x140] sm:$0xf]
    %v194 = vld [vmem:[#allocation5 + $0x144] sm:$0xf]
    %v195 = vld [vmem:[#allocation5 + $0x148] sm:$0xf]
    %v196 = vld [vmem:[#allocation5 + $0x14c] sm:$0xf]
    %v197 = vld [vmem:[#allocation5 + $0x150] sm:$0xf]
    %v198 = vld [vmem:[#allocation5 + $0x154] sm:$0xf]
    %v199 = vld [vmem:[#allocation5 + $0x158] sm:$0xf]
    %v200 = vld [vmem:[#allocation5 + $0x15c] sm:$0xf]
    %v201 = vld [vmem:[#allocation5 + $0x160] sm:$0xf]
    %v202 = vld [vmem:[#allocation5 + $0x164] sm:$0xf]
    %v203 = vld [vmem:[#allocation5 + $0x168] sm:$0xf]
    %v204 = vld [vmem:[#allocation5 + $0x16c] sm:$0xf]
    %v205 = vld [vmem:[#allocation5 + $0x170] sm:$0xf]
    %v206 = vld [vmem:[#allocation5 + $0x174] sm:$0xf]
    %v207 = vld [vmem:[#allocation5 + $0x178] sm:$0xf]
    %v208 = vld [vmem:[#allocation5 + $0x17c] sm:$0xf]
    %v209 = vld [vmem:[#allocation5 + $0x180] sm:$0xf]
    %v210 = vld [vmem:[#allocation5 + $0x184] sm:$0xf]
    %v211 = vld [vmem:[#allocation5 + $0x188] sm:$0xf]
    %v212 = vld [vmem:[#allocation5 + $0x18c] sm:$0xf]
    %v213 = vld [vmem:[#allocation5 + $0x190] sm:$0xf]
    %v214 = vld [vmem:[#allocation5 + $0x194] sm:$0xf]
    %v215 = vld [vmem:[#allocation5 + $0x198] sm:$0xf]
    %v216 = vld [vmem:[#allocation5 + $0x19c] sm:$0xf]
    %v217 = vld [vmem:[#allocation5 + $0x1a0] sm:$0xf]
    %v218 = vld [vmem:[#allocation5 + $0x1a4] sm:$0xf]
    %v219 = vld [vmem:[#allocation5 + $0x1a8] sm:$0xf]
    %v220 = vld [vmem:[#allocation5 + $0x1ac] sm:$0xf]
    %v221 = vld [vmem:[#allocation5 + $0x1b0] sm:$0xf]
    %v222 = vld [vmem:[#allocation5 + $0x1b4] sm:$0xf]
    %v223 = vld [vmem:[#allocation5 + $0x1b8] sm:$0xf]
    %v224 = vld [vmem:[#allocation5 + $0x1bc] sm:$0xf]
    %v225 = vld [vmem:[#allocation5 + $0x1c0] sm:$0xf]
    %v226 = vld [vmem:[#allocation5 + $0x1c4] sm:$0xf]
    %v227 = vld [vmem:[#allocation5 + $0x1c8] sm:$0xf]
    %v228 = vld [vmem:[#allocation5 + $0x1cc] sm:$0xf]
    %v229 = vld [vmem:[#allocation5 + $0x1d0] sm:$0xf]
    %v230 = vld [vmem:[#allocation5 + $0x1d4] sm:$0xf]
    %v231 = vld [vmem:[#allocation5 + $0x1d8] sm:$0xf]
    %v232 = vld [vmem:[#allocation5 + $0x1dc] sm:$0xf]
    %v233 = vld [vmem:[#allocation5 + $0x1e0] sm:$0xf]
    %v234 = vld [vmem:[#allocation5 + $0x1e4] sm:$0xf]
    %v235 = vld [vmem:[#allocation5 + $0x1e8] sm:$0xf]
    %v236 = vld [vmem:[#allocation5 + $0x1ec] sm:$0xf]
    %v237 = vld [vmem:[#allocation5 + $0x1f0] sm:$0xf]
    %v238 = vld [vmem:[#allocation5 + $0x1f4] sm:$0xf]
    %v239 = vld [vmem:[#allocation5 + $0x1f8] sm:$0xf]
    %v240 = vld [vmem:[#allocation5 + $0x1fc] sm:$0xf]
    %v241 = vld [vmem:[%s2] sm:$0x1]
    %v243 = vlaneseq
    %v244 = vshrl.u32 %v243, 7
    %v245 = vsub.s32 0, %v244
    %v246 = vrot.slane %v241, %v245
    %v256 = vunpack.c.l.b16 %v105
    %v257 = vunpack.c.h.b16 %v105
    %v258 = vunpack.c.l.b16 %v106
    %v259 = vunpack.c.h.b16 %v106
    %v260 = vunpack.c.l.b16 %v107
    %v261 = vunpack.c.h.b16 %v107
    %v262 = vunpack.c.l.b16 %v108
    %v263 = vunpack.c.h.b16 %v108
    %v264 = vunpack.c.l.b16 %v109
    %v265 = vunpack.c.h.b16 %v109
    %v266 = vunpack.c.l.b16 %v110
    %v267 = vunpack.c.h.b16 %v110
    %v268 = vunpack.c.l.b16 %v111
    %v269 = vunpack.c.h.b16 %v111
    %v270 = vunpack.c.l.b16 %v112
    %v271 = vunpack.c.h.b16 %v112
    %v272 = vpack.c.b16 %v264, %v256
    %v273 = vpack.c.b16 %v265, %v257
    %v274 = vpack.c.b16 %v266, %v258
    %v275 = vpack.c.b16 %v267, %v259
    %v276 = vpack.c.b16 %v268, %v260
    %v277 = vpack.c.b16 %v269, %v261
    %v278 = vpack.c.b16 %v270, %v262
    %v279 = vpack.c.b16 %v271, %v263
    %v416 = vunpack.c.l.b16 %v113
    %v417 = vunpack.c.l.b16 %v114
    %v418 = vunpack.c.l.b16 %v115
    %v419 = vunpack.c.l.b16 %v116
    %v420 = vunpack.c.l.b16 %v117
    %v421 = vunpack.c.l.b16 %v118
    %v422 = vunpack.c.l.b16 %v119
    %v423 = vunpack.c.l.b16 %v120
    %v424 = vunpack.c.l.b16 %v121
    %v425 = vunpack.c.l.b16 %v122
    %v426 = vunpack.c.l.b16 %v123
    %v427 = vunpack.c.l.b16 %v124
    %v428 = vunpack.c.l.b16 %v125
    %v429 = vunpack.c.l.b16 %v126
    %v430 = vunpack.c.l.b16 %v127
    %v431 = vunpack.c.l.b16 %v128
    %v432 = vunpack.c.l.b16 %v129
    %v433 = vunpack.c.l.b16 %v130
    %v434 = vunpack.c.l.b16 %v131
    %v435 = vunpack.c.l.b16 %v132
    %v436 = vunpack.c.l.b16 %v133
    %v437 = vunpack.c.l.b16 %v134
    %v438 = vunpack.c.l.b16 %v135
    %v439 = vunpack.c.l.b16 %v136
    %v440 = vunpack.c.l.b16 %v137
    %v441 = vunpack.c.l.b16 %v138
    %v442 = vunpack.c.l.b16 %v139
    %v443 = vunpack.c.l.b16 %v140
    %v444 = vunpack.c.l.b16 %v141
    %v445 = vunpack.c.l.b16 %v142
    %v446 = vunpack.c.l.b16 %v143
    %v447 = vunpack.c.l.b16 %v144
    %v448 = vunpack.c.l.b16 %v145
    %v449 = vunpack.c.l.b16 %v146
    %v450 = vunpack.c.l.b16 %v147
    %v451 = vunpack.c.l.b16 %v148
    %v452 = vunpack.c.l.b16 %v149
    %v453 = vunpack.c.l.b16 %v150
    %v454 = vunpack.c.l.b16 %v151
    %v455 = vunpack.c.l.b16 %v152
    %v456 = vunpack.c.l.b16 %v153
    %v457 = vunpack.c.l.b16 %v154
    %v458 = vunpack.c.l.b16 %v155
    %v459 = vunpack.c.l.b16 %v156
    %v460 = vunpack.c.l.b16 %v157
    %v461 = vunpack.c.l.b16 %v158
    %v462 = vunpack.c.l.b16 %v159
    %v463 = vunpack.c.l.b16 %v160
    %v464 = vunpack.c.l.b16 %v161
    %v465 = vunpack.c.l.b16 %v162
    %v466 = vunpack.c.l.b16 %v163
    %v467 = vunpack.c.l.b16 %v164
    %v468 = vunpack.c.l.b16 %v165
    %v469 = vunpack.c.l.b16 %v166
    %v470 = vunpack.c.l.b16 %v167
    %v471 = vunpack.c.l.b16 %v168
    %v472 = vunpack.c.l.b16 %v169
    %v473 = vunpack.c.l.b16 %v170
    %v474 = vunpack.c.l.b16 %v171
    %v475 = vunpack.c.l.b16 %v172
    %v476 = vunpack.c.l.b16 %v173
    %v477 = vunpack.c.l.b16 %v174
    %v478 = vunpack.c.l.b16 %v175
    %v479 = vunpack.c.l.b16 %v176
    %v480 = vunpack.c.l.b16 %v177
    %v481 = vunpack.c.l.b16 %v178
    %v482 = vunpack.c.l.b16 %v179
    %v483 = vunpack.c.l.b16 %v180
    %v484 = vunpack.c.l.b16 %v181
    %v485 = vunpack.c.l.b16 %v182
    %v486 = vunpack.c.l.b16 %v183
    %v487 = vunpack.c.l.b16 %v184
    %v488 = vunpack.c.l.b16 %v185
    %v489 = vunpack.c.l.b16 %v186
    %v490 = vunpack.c.l.b16 %v187
    %v491 = vunpack.c.l.b16 %v188
    %v492 = vunpack.c.l.b16 %v189
    %v493 = vunpack.c.l.b16 %v190
    %v494 = vunpack.c.l.b16 %v191
    %v495 = vunpack.c.l.b16 %v192
    %v496 = vunpack.c.l.b16 %v193
    %v497 = vunpack.c.l.b16 %v194
    %v498 = vunpack.c.l.b16 %v195
    %v499 = vunpack.c.l.b16 %v196
    %v500 = vunpack.c.l.b16 %v197
    %v501 = vunpack.c.l.b16 %v198
    %v502 = vunpack.c.l.b16 %v199
    %v503 = vunpack.c.l.b16 %v200
    %v504 = vunpack.c.l.b16 %v201
    %v505 = vunpack.c.l.b16 %v202
    %v506 = vunpack.c.l.b16 %v203
    %v507 = vunpack.c.l.b16 %v204
    %v508 = vunpack.c.l.b16 %v205
    %v509 = vunpack.c.l.b16 %v206
    %v510 = vunpack.c.l.b16 %v207
    %v511 = vunpack.c.l.b16 %v208
    %v512 = vunpack.c.l.b16 %v209
    %v513 = vunpack.c.l.b16 %v210
    %v514 = vunpack.c.l.b16 %v211
    %v515 = vunpack.c.l.b16 %v212
    %v516 = vunpack.c.l.b16 %v213
    %v517 = vunpack.c.l.b16 %v214
    %v518 = vunpack.c.l.b16 %v215
    %v519 = vunpack.c.l.b16 %v216
    %v520 = vunpack.c.l.b16 %v217
    %v521 = vunpack.c.l.b16 %v218
    %v522 = vunpack.c.l.b16 %v219
    %v523 = vunpack.c.l.b16 %v220
    %v524 = vunpack.c.l.b16 %v221
    %v525 = vunpack.c.l.b16 %v222
    %v526 = vunpack.c.l.b16 %v223
    %v527 = vunpack.c.l.b16 %v224
    %v528 = vunpack.c.l.b16 %v225
    %v529 = vunpack.c.l.b16 %v226
    %v530 = vunpack.c.l.b16 %v227
    %v531 = vunpack.c.l.b16 %v228
    %v532 = vunpack.c.l.b16 %v229
    %v533 = vunpack.c.l.b16 %v230
    %v534 = vunpack.c.l.b16 %v231
    %v535 = vunpack.c.l.b16 %v232
    %v536 = vunpack.c.l.b16 %v233
    %v537 = vunpack.c.l.b16 %v234
    %v538 = vunpack.c.l.b16 %v235
    %v539 = vunpack.c.l.b16 %v236
    %v540 = vunpack.c.l.b16 %v237
    %v541 = vunpack.c.l.b16 %v238
    %v542 = vunpack.c.l.b16 %v239
    %v543 = vunpack.c.l.b16 %v240
    %v544 = vpack.c.b16 %v417, %v416
    %v545 = vpack.c.b16 %v419, %v418
    %v546 = vpack.c.b16 %v421, %v420
    %v547 = vpack.c.b16 %v423, %v422
    %v548 = vpack.c.b16 %v425, %v424
    %v549 = vpack.c.b16 %v427, %v426
    %v550 = vpack.c.b16 %v429, %v428
    %v551 = vpack.c.b16 %v431, %v430
    %v552 = vpack.c.b16 %v433, %v432
    %v553 = vpack.c.b16 %v435, %v434
    %v554 = vpack.c.b16 %v437, %v436
    %v555 = vpack.c.b16 %v439, %v438
    %v556 = vpack.c.b16 %v441, %v440
    %v557 = vpack.c.b16 %v443, %v442
    %v558 = vpack.c.b16 %v445, %v444
    %v559 = vpack.c.b16 %v447, %v446
    %v560 = vpack.c.b16 %v449, %v448
    %v561 = vpack.c.b16 %v451, %v450
    %v562 = vpack.c.b16 %v453, %v452
    %v563 = vpack.c.b16 %v455, %v454
    %v564 = vpack.c.b16 %v457, %v456
    %v565 = vpack.c.b16 %v459, %v458
    %v566 = vpack.c.b16 %v461, %v460
    %v567 = vpack.c.b16 %v463, %v462
    %v568 = vpack.c.b16 %v465, %v464
    %v569 = vpack.c.b16 %v467, %v466
    %v570 = vpack.c.b16 %v469, %v468
    %v571 = vpack.c.b16 %v471, %v470
    %v572 = vpack.c.b16 %v473, %v472
    %v573 = vpack.c.b16 %v475, %v474
    %v574 = vpack.c.b16 %v477, %v476
    %v575 = vpack.c.b16 %v479, %v478
    %v576 = vpack.c.b16 %v481, %v480
    %v577 = vpack.c.b16 %v483, %v482
    %v578 = vpack.c.b16 %v485, %v484
    %v579 = vpack.c.b16 %v487, %v486
    %v580 = vpack.c.b16 %v489, %v488
    %v581 = vpack.c.b16 %v491, %v490
    %v582 = vpack.c.b16 %v493, %v492
    %v583 = vpack.c.b16 %v495, %v494
    %v584 = vpack.c.b16 %v497, %v496
    %v585 = vpack.c.b16 %v499, %v498
    %v586 = vpack.c.b16 %v501, %v500
    %v587 = vpack.c.b16 %v503, %v502
    %v588 = vpack.c.b16 %v505, %v504
    %v589 = vpack.c.b16 %v507, %v506
    %v590 = vpack.c.b16 %v509, %v508
    %v591 = vpack.c.b16 %v511, %v510
    %v592 = vpack.c.b16 %v513, %v512
    %v593 = vpack.c.b16 %v515, %v514
    %v594 = vpack.c.b16 %v517, %v516
    %v595 = vpack.c.b16 %v519, %v518
    %v596 = vpack.c.b16 %v521, %v520
    %v597 = vpack.c.b16 %v523, %v522
    %v598 = vpack.c.b16 %v525, %v524
    %v599 = vpack.c.b16 %v527, %v526
    %v600 = vpack.c.b16 %v529, %v528
    %v601 = vpack.c.b16 %v531, %v530
    %v602 = vpack.c.b16 %v533, %v532
    %v603 = vpack.c.b16 %v535, %v534
    %v604 = vpack.c.b16 %v537, %v536
    %v605 = vpack.c.b16 %v539, %v538
    %v606 = vpack.c.b16 %v541, %v540
    %v607 = vpack.c.b16 %v543, %v542
    %672 = vmatprep.subr.bf16.mxu0 0
    %673 = vmatpush1.bf16.msra.mxu0 %v544
    %674 = vmatprep.subr.bf16.mxu0 0
    %675 = vmatpush1.bf16.msra.mxu0 %v545
    %676 = vmatprep.subr.bf16.mxu0 0
    %677 = vmatpush1.bf16.msra.mxu0 %v546
    %678 = vmatprep.subr.bf16.mxu0 0
    %679 = vmatpush1.bf16.msra.mxu0 %v547
    %680 = vmatprep.subr.bf16.mxu0 0
    %681 = vmatpush1.bf16.msra.mxu0 %v548
    %682 = vmatprep.subr.bf16.mxu0 0
    %683 = vmatpush1.bf16.msra.mxu0 %v549
    %684 = vmatprep.subr.bf16.mxu0 0
    %685 = vmatpush1.bf16.msra.mxu0 %v550
    %686 = vmatprep.subr.bf16.mxu0 0
    %687 = vmatpush1.bf16.msra.mxu0 %v551
    %688 = vmatprep.subr.bf16.mxu0 0
    %689 = vmatpush1.bf16.msra.mxu0 %v552
    %690 = vmatprep.subr.bf16.mxu0 0
    %691 = vmatpush1.bf16.msra.mxu0 %v553
    %692 = vmatprep.subr.bf16.mxu0 0
    %693 = vmatpush1.bf16.msra.mxu0 %v554
    %694 = vmatprep.subr.bf16.mxu0 0
    %695 = vmatpush1.bf16.msra.mxu0 %v555
    %696 = vmatprep.subr.bf16.mxu0 0
    %697 = vmatpush1.bf16.msra.mxu0 %v556
    %698 = vmatprep.subr.bf16.mxu0 0
    %699 = vmatpush1.bf16.msra.mxu0 %v557
    %700 = vmatprep.subr.bf16.mxu0 0
    %701 = vmatpush1.bf16.msra.mxu0 %v558
    %702 = vmatprep.subr.bf16.mxu0 0
    %703 = vmatpush1.bf16.msra.mxu0 %v559
    %704 = vmatprep.mubr.bf16.mxu0 %v273
    %705 = vmatmul.mubr.bf16.gmra.mrb[0].mxu0 %v272
    %v706 = vpop.f32.mrb[0].mxu0
    %v707 = vadd.f32 %v246, %v706
    %v708 = vpop.f32.mrb[0].mxu0
    %v709 = vpop.f32.mrb[0].mxu0
    %v710 = vadd.f32 %v246, %v709
    %v711 = vpop.f32.mrb[0].mxu0
    %712 = vdwg.mxu0
    %713 = vmatprep.subr.bf16.mxu0 0
    %714 = vmatpush1.bf16.msra.mxu0 %v560
    %715 = vmatprep.subr.bf16.mxu0 0
    %716 = vmatpush1.bf16.msra.mxu0 %v561
    %717 = vmatprep.subr.bf16.mxu0 0
    %718 = vmatpush1.bf16.msra.mxu0 %v562
    %719 = vmatprep.subr.bf16.mxu0 0
    %720 = vmatpush1.bf16.msra.mxu0 %v563
    %721 = vmatprep.subr.bf16.mxu0 0
    %722 = vmatpush1.bf16.msra.mxu0 %v564
    %723 = vmatprep.subr.bf16.mxu0 0
    %724 = vmatpush1.bf16.msra.mxu0 %v565
    %725 = vmatprep.subr.bf16.mxu0 0
    %726 = vmatpush1.bf16.msra.mxu0 %v566
    %727 = vmatprep.subr.bf16.mxu0 0
    %728 = vmatpush1.bf16.msra.mxu0 %v567
    %729 = vmatprep.subr.bf16.mxu0 0
    %730 = vmatpush1.bf16.msra.mxu0 %v568
    %731 = vmatprep.subr.bf16.mxu0 0
    %732 = vmatpush1.bf16.msra.mxu0 %v569
    %733 = vmatprep.subr.bf16.mxu0 0
    %734 = vmatpush1.bf16.msra.mxu0 %v570
    %735 = vmatprep.subr.bf16.mxu0 0
    %736 = vmatpush1.bf16.msra.mxu0 %v571
    %737 = vmatprep.subr.bf16.mxu0 0
    %738 = vmatpush1.bf16.msra.mxu0 %v572
    %739 = vmatprep.subr.bf16.mxu0 0
    %740 = vmatpush1.bf16.msra.mxu0 %v573
    %741 = vmatprep.subr.bf16.mxu0 0
    %742 = vmatpush1.bf16.msra.mxu0 %v574
    %743 = vmatprep.subr.bf16.mxu0 0
    %744 = vmatpush1.bf16.msra.mxu0 %v575
    %745 = vmatprep.mubr.bf16.mxu0 %v275
    %746 = vmatmul.mubr.bf16.gmra.mrb[0].mxu0 %v274
    %v747 = vpop.f32.mrb[0].mxu0
    %v748 = vadd.f32 %v707, %v747
    %v749 = vpop.f32.mrb[0].mxu0
    %v750 = vpop.f32.mrb[0].mxu0
    %v751 = vadd.f32 %v710, %v750
    %v752 = vpop.f32.mrb[0].mxu0
    %753 = vdwg.mxu0
    %754 = vmatprep.subr.bf16.mxu0 0
    %755 = vmatpush1.bf16.msra.mxu0 %v576
    %756 = vmatprep.subr.bf16.mxu0 0
    %757 = vmatpush1.bf16.msra.mxu0 %v577
    %758 = vmatprep.subr.bf16.mxu0 0
    %759 = vmatpush1.bf16.msra.mxu0 %v578
    %760 = vmatprep.subr.bf16.mxu0 0
    %761 = vmatpush1.bf16.msra.mxu0 %v579
    %762 = vmatprep.subr.bf16.mxu0 0
    %763 = vmatpush1.bf16.msra.mxu0 %v580
    %764 = vmatprep.subr.bf16.mxu0 0
    %765 = vmatpush1.bf16.msra.mxu0 %v581
    %766 = vmatprep.subr.bf16.mxu0 0
    %767 = vmatpush1.bf16.msra.mxu0 %v582
    %768 = vmatprep.subr.bf16.mxu0 0
    %769 = vmatpush1.bf16.msra.mxu0 %v583
    %770 = vmatprep.subr.bf16.mxu0 0
    %771 = vmatpush1.bf16.msra.mxu0 %v584
    %772 = vmatprep.subr.bf16.mxu0 0
    %773 = vmatpush1.bf16.msra.mxu0 %v585
    %774 = vmatprep.subr.bf16.mxu0 0
    %775 = vmatpush1.bf16.msra.mxu0 %v586
    %776 = vmatprep.subr.bf16.mxu0 0
    %777 = vmatpush1.bf16.msra.mxu0 %v587
    %778 = vmatprep.subr.bf16.mxu0 0
    %779 = vmatpush1.bf16.msra.mxu0 %v588
    %780 = vmatprep.subr.bf16.mxu0 0
    %781 = vmatpush1.bf16.msra.mxu0 %v589
    %782 = vmatprep.subr.bf16.mxu0 0
    %783 = vmatpush1.bf16.msra.mxu0 %v590
    %784 = vmatprep.subr.bf16.mxu0 0
    %785 = vmatpush1.bf16.msra.mxu0 %v591
    %786 = vmatprep.mubr.bf16.mxu0 %v277
    %787 = vmatmul.mubr.bf16.gmra.mrb[0].mxu0 %v276
    %v788 = vpop.f32.mrb[0].mxu0
    %v789 = vadd.f32 %v748, %v788
    %v790 = vpop.f32.mrb[0].mxu0
    %v791 = vpop.f32.mrb[0].mxu0
    %v792 = vadd.f32 %v751, %v791
    %v793 = vpop.f32.mrb[0].mxu0
    %794 = vdwg.mxu0
    %795 = vmatprep.subr.bf16.mxu0 0
    %796 = vmatpush1.bf16.msra.mxu0 %v592
    %797 = vmatprep.subr.bf16.mxu0 0
    %798 = vmatpush1.bf16.msra.mxu0 %v593
    %799 = vmatprep.subr.bf16.mxu0 0
    %800 = vmatpush1.bf16.msra.mxu0 %v594
    %801 = vmatprep.subr.bf16.mxu0 0
    %802 = vmatpush1.bf16.msra.mxu0 %v595
    %803 = vmatprep.subr.bf16.mxu0 0
    %804 = vmatpush1.bf16.msra.mxu0 %v596
    %805 = vmatprep.subr.bf16.mxu0 0
    %806 = vmatpush1.bf16.msra.mxu0 %v597
    %807 = vmatprep.subr.bf16.mxu0 0
    %808 = vmatpush1.bf16.msra.mxu0 %v598
    %809 = vmatprep.subr.bf16.mxu0 0
    %810 = vmatpush1.bf16.msra.mxu0 %v599
    %811 = vmatprep.subr.bf16.mxu0 0
    %812 = vmatpush1.bf16.msra.mxu0 %v600
    %813 = vmatprep.subr.bf16.mxu0 0
    %814 = vmatpush1.bf16.msra.mxu0 %v601
    %815 = vmatprep.subr.bf16.mxu0 0
    %816 = vmatpush1.bf16.msra.mxu0 %v602
    %817 = vmatprep.subr.bf16.mxu0 0
    %818 = vmatpush1.bf16.msra.mxu0 %v603
    %819 = vmatprep.subr.bf16.mxu0 0
    %820 = vmatpush1.bf16.msra.mxu0 %v604
    %821 = vmatprep.subr.bf16.mxu0 0
    %822 = vmatpush1.bf16.msra.mxu0 %v605
    %823 = vmatprep.subr.bf16.mxu0 0
    %824 = vmatpush1.bf16.msra.mxu0 %v606
    %825 = vmatprep.subr.bf16.mxu0 0
    %826 = vmatpush1.bf16.msra.mxu0 %v607
    %827 = vmatprep.mubr.bf16.mxu0 %v279
    %828 = vmatmul.mubr.bf16.gmra.mrb[0].mxu0 %v278
    %v829 = vpop.f32.mrb[0].mxu0
    %v830 = vadd.f32 %v789, %v829
    %v831 = vpop.f32.mrb[0].mxu0
    %v832 = vpop.f32.mrb[0].mxu0
    %v833 = vadd.f32 %v792, %v832
    %v834 = vpop.f32.mrb[0].mxu0
    %835 = vdwg.mxu0
    %v836 = vmul.f32 %v830, 0.01
    %v837 = vmul.f32 %v833, 0.01
    %v838 = vmax.f32 %v830, %v836
    %v839 = vmax.f32 %v833, %v837
    %v840 = vpack.c.bf16 %v839, %v838
    %v841 = vld [vmem:[#allocation7] sm:$0xf]
    %v842 = vld [vmem:[#allocation7 + $0x4] sm:$0xf]
    %v843 = vld [vmem:[#allocation7 + $0x8] sm:$0xf]
    %v844 = vld [vmem:[#allocation7 + $0xc] sm:$0xf]
    %v845 = vld [vmem:[#allocation7 + $0x10] sm:$0xf]
    %v846 = vld [vmem:[#allocation7 + $0x14] sm:$0xf]
    %v847 = vld [vmem:[#allocation7 + $0x18] sm:$0xf]
    %v848 = vld [vmem:[#allocation7 + $0x1c] sm:$0xf]
    %v849 = vld [vmem:[#allocation7 + $0x20] sm:$0xf]
    %v850 = vld [vmem:[#allocation7 + $0x24] sm:$0xf]
    %v851 = vld [vmem:[#allocation7 + $0x28] sm:$0xf]
    %v852 = vld [vmem:[#allocation7 + $0x2c] sm:$0xf]
    %v853 = vld [vmem:[#allocation7 + $0x30] sm:$0xf]
    %v854 = vld [vmem:[#allocation7 + $0x34] sm:$0xf]
    %v855 = vld [vmem:[#allocation7 + $0x38] sm:$0xf]
    %v856 = vld [vmem:[#allocation7 + $0x3c] sm:$0xf]
    %v857 = vld [vmem:[%s4] sm:$0x1]
    %v859 = vlaneseq
    %v860 = vshrl.u32 %v859, 7
    %v861 = vsub.s32 0, %v860
    %v862 = vrot.slane %v857, %v861
    %v880 = vunpack.c.l.b16 %v841
    %v881 = vunpack.c.l.b16 %v842
    %v882 = vunpack.c.l.b16 %v843
    %v883 = vunpack.c.l.b16 %v844
    %v884 = vunpack.c.l.b16 %v845
    %v885 = vunpack.c.l.b16 %v846
    %v886 = vunpack.c.l.b16 %v847
    %v887 = vunpack.c.l.b16 %v848
    %v888 = vunpack.c.l.b16 %v849
    %v889 = vunpack.c.l.b16 %v850
    %v890 = vunpack.c.l.b16 %v851
    %v891 = vunpack.c.l.b16 %v852
    %v892 = vunpack.c.l.b16 %v853
    %v893 = vunpack.c.l.b16 %v854
    %v894 = vunpack.c.l.b16 %v855
    %v895 = vunpack.c.l.b16 %v856
    %v896 = vpack.c.b16 %v881, %v880
    %v897 = vpack.c.b16 %v883, %v882
    %v898 = vpack.c.b16 %v885, %v884
    %v899 = vpack.c.b16 %v887, %v886
    %v900 = vpack.c.b16 %v889, %v888
    %v901 = vpack.c.b16 %v891, %v890
    %v902 = vpack.c.b16 %v893, %v892
    %v903 = vpack.c.b16 %v895, %v894
    %912 = vmatprep.subr.bf16.mxu0 0
    %913 = vmatpush1.bf16.msra.mxu0 %v896
    %914 = vmatprep.subr.bf16.mxu0 0
    %915 = vmatpush1.bf16.msra.mxu0 %v897
    %916 = vmatprep.subr.bf16.mxu0 0
    %917 = vmatpush1.bf16.msra.mxu0 %v898
    %918 = vmatprep.subr.bf16.mxu0 0
    %919 = vmatpush1.bf16.msra.mxu0 %v899
    %920 = vmatprep.subr.bf16.mxu0 0
    %921 = vmatpush1.bf16.msra.mxu0 %v900
    %922 = vmatprep.subr.bf16.mxu0 0
    %923 = vmatpush1.bf16.msra.mxu0 %v901
    %924 = vmatprep.subr.bf16.mxu0 0
    %925 = vmatpush1.bf16.msra.mxu0 %v902
    %926 = vmatprep.subr.bf16.mxu0 0
    %927 = vmatpush1.bf16.msra.mxu0 %v903
    %928 = vmatprep.subr.bf16.mxu0 0
    %929 = vmatpush1.bf16.msra.mxu0 0
    %930 = vmatprep.subr.bf16.mxu0 0
    %931 = vmatpush1.bf16.msra.mxu0 0
    %932 = vmatprep.subr.bf16.mxu0 0
    %933 = vmatpush1.bf16.msra.mxu0 0
    %934 = vmatprep.subr.bf16.mxu0 0
    %935 = vmatpush1.bf16.msra.mxu0 0
    %936 = vmatprep.subr.bf16.mxu0 0
    %937 = vmatpush1.bf16.msra.mxu0 0
    %938 = vmatprep.subr.bf16.mxu0 0
    %939 = vmatpush1.bf16.msra.mxu0 0
    %940 = vmatprep.subr.bf16.mxu0 0
    %941 = vmatpush1.bf16.msra.mxu0 0
    %942 = vmatprep.subr.bf16.mxu0 0
    %943 = vmatpush1.bf16.msra.mxu0 0
    %944 = vmatprep.mubr.bf16.mxu0 0
    %945 = vmatmul.mubr.bf16.gmra.mrb[0].mxu0 %v840
    %v946 = vpop.f32.mrb[0].mxu0
    %v947 = vadd.f32 %v862, %v946
    %v948 = vpop.f32.mrb[0].mxu0
    %v949 = vpop.f32.mrb[0].mxu0
    %v950 = vadd.f32 %v862, %v949
    %v951 = vpop.f32.mrb[0].mxu0
    %952 = vdwg.mxu0
    %v953 = vmul.f32 %v947, 0.01
    %v954 = vmul.f32 %v950, 0.01
    %v955 = vmax.f32 %v947, %v953
    %v956 = vmax.f32 %v950, %v954
    %v957 = vpack.c.bf16 %v956, %v955
    %v958 = vld [vmem:[#allocation8] sm:$0xf]
    %v959 = vld [vmem:[#allocation8 + $0x4] sm:$0xf]
    %v960 = vld [vmem:[#allocation8 + $0x8] sm:$0xf]
    %v961 = vld [vmem:[#allocation8 + $0xc] sm:$0xf]
    %v962 = vld [vmem:[#allocation8 + $0x10] sm:$0xf]
    %v963 = vld [vmem:[#allocation8 + $0x14] sm:$0xf]
    %v964 = vld [vmem:[#allocation8 + $0x18] sm:$0xf]
    %v965 = vld [vmem:[#allocation8 + $0x1c] sm:$0xf]
    %v966 = vld [vmem:[#allocation8 + $0x20] sm:$0xf]
    %v967 = vld [vmem:[#allocation8 + $0x24] sm:$0xf]
    %v968 = vld [vmem:[#allocation8 + $0x28] sm:$0xf]
    %v969 = vld [vmem:[#allocation8 + $0x2c] sm:$0xf]
    %v970 = vld [vmem:[#allocation8 + $0x30] sm:$0xf]
    %v971 = vld [vmem:[#allocation8 + $0x34] sm:$0xf]
    %v972 = vld [vmem:[#allocation8 + $0x38] sm:$0xf]
    %v973 = vld [vmem:[#allocation8 + $0x3c] sm:$0xf]
    %v974 = vld [vmem:[%s6] sm:$0x1]
    %v976 = vlaneseq
    %v977 = vshrl.u32 %v976, 7
    %v978 = vsub.s32 0, %v977
    %v979 = vrot.slane %v974, %v978
    %v997 = vunpack.c.l.b16 %v958
    %v998 = vunpack.c.l.b16 %v959
    %v999 = vunpack.c.l.b16 %v960
    %v1000 = vunpack.c.l.b16 %v961
    %v1001 = vunpack.c.l.b16 %v962
    %v1002 = vunpack.c.l.b16 %v963
    %v1003 = vunpack.c.l.b16 %v964
    %v1004 = vunpack.c.l.b16 %v965
    %v1005 = vunpack.c.l.b16 %v966
    %v1006 = vunpack.c.l.b16 %v967
    %v1007 = vunpack.c.l.b16 %v968
    %v1008 = vunpack.c.l.b16 %v969
    %v1009 = vunpack.c.l.b16 %v970
    %v1010 = vunpack.c.l.b16 %v971
    %v1011 = vunpack.c.l.b16 %v972
    %v1012 = vunpack.c.l.b16 %v973
    %v1013 = vpack.c.b16 %v998, %v997
    %v1014 = vpack.c.b16 %v1000, %v999
    %v1015 = vpack.c.b16 %v1002, %v1001
    %v1016 = vpack.c.b16 %v1004, %v1003
    %v1017 = vpack.c.b16 %v1006, %v1005
    %v1018 = vpack.c.b16 %v1008, %v1007
    %v1019 = vpack.c.b16 %v1010, %v1009
    %v1020 = vpack.c.b16 %v1012, %v1011
    %1029 = vmatprep.subr.bf16.mxu0 0
    %1030 = vmatpush1.bf16.msra.mxu0 %v1013
    %1031 = vmatprep.subr.bf16.mxu0 0
    %1032 = vmatpush1.bf16.msra.mxu0 %v1014
    %1033 = vmatprep.subr.bf16.mxu0 0
    %1034 = vmatpush1.bf16.msra.mxu0 %v1015
    %1035 = vmatprep.subr.bf16.mxu0 0
    %1036 = vmatpush1.bf16.msra.mxu0 %v1016
    %1037 = vmatprep.subr.bf16.mxu0 0
    %1038 = vmatpush1.bf16.msra.mxu0 %v1017
    %1039 = vmatprep.subr.bf16.mxu0 0
    %1040 = vmatpush1.bf16.msra.mxu0 %v1018
    %1041 = vmatprep.subr.bf16.mxu0 0
    %1042 = vmatpush1.bf16.msra.mxu0 %v1019
    %1043 = vmatprep.subr.bf16.mxu0 0
    %1044 = vmatpush1.bf16.msra.mxu0 %v1020
    %1045 = vmatprep.subr.bf16.mxu0 0
    %1046 = vmatpush1.bf16.msra.mxu0 0
    %1047 = vmatprep.subr.bf16.mxu0 0
    %1048 = vmatpush1.bf16.msra.mxu0 0
    %1049 = vmatprep.subr.bf16.mxu0 0
    %1050 = vmatpush1.bf16.msra.mxu0 0
    %1051 = vmatprep.subr.bf16.mxu0 0
    %1052 = vmatpush1.bf16.msra.mxu0 0
    %1053 = vmatprep.subr.bf16.mxu0 0
    %1054 = vmatpush1.bf16.msra.mxu0 0
    %1055 = vmatprep.subr.bf16.mxu0 0
    %1056 = vmatpush1.bf16.msra.mxu0 0
    %1057 = vmatprep.subr.bf16.mxu0 0
    %1058 = vmatpush1.bf16.msra.mxu0 0
    %1059 = vmatprep.subr.bf16.mxu0 0
    %1060 = vmatpush1.bf16.msra.mxu0 0
    %1061 = vmatprep.mubr.bf16.mxu0 0
    %1062 = vmatmul.mubr.bf16.gmra.mrb[0].mxu0 %v957
    %v1063 = vpop.f32.mrb[0].mxu0
    %v1064 = vadd.f32 %v979, %v1063
    %v1065 = vpop.f32.mrb[0].mxu0
    %v1066 = vpop.f32.mrb[0].mxu0
    %v1067 = vadd.f32 %v979, %v1066
    %v1068 = vpop.f32.mrb[0].mxu0
    %1069 = vdwg.mxu0
    %v1070 = vmul.f32 %v1064, 0.01
    %v1071 = vmul.f32 %v1067, 0.01
    %v1072 = vmax.f32 %v1064, %v1070
    %v1073 = vmax.f32 %v1067, %v1071
    %v1074 = vpack.c.bf16 %v1073, %v1072
    %1075 = vst [vmem:[#allocation12] sm:$0xff] %v1072
    %1076 = vst [vmem:[#allocation12 + $0x8] sm:$0xff] %v1073
    %v1077 = vld [vmem:[#allocation10] sm:$0xf]
    %v1078 = vld [vmem:[#allocation10 + $0x4] sm:$0xf]
    %v1079 = vld [vmem:[#allocation10 + $0x8] sm:$0xf]
    %v1080 = vld [vmem:[#allocation10 + $0xc] sm:$0xf]
    %v1081 = vld [vmem:[#allocation10 + $0x10] sm:$0xf]
    %v1082 = vld [vmem:[#allocation10 + $0x14] sm:$0xf]
    %v1083 = vld [vmem:[#allocation10 + $0x18] sm:$0xf]
    %v1084 = vld [vmem:[#allocation10 + $0x1c] sm:$0xf]
    %v1085 = vld [vmem:[#allocation10 + $0x20] sm:$0xf]
    %v1086 = vld [vmem:[#allocation10 + $0x24] sm:$0xf]
    %v1087 = vld [vmem:[#allocation10 + $0x28] sm:$0xf]
    %v1088 = vld [vmem:[#allocation10 + $0x2c] sm:$0xf]
    %v1089 = vld [vmem:[#allocation10 + $0x30] sm:$0xf]
    %v1090 = vld [vmem:[#allocation10 + $0x34] sm:$0xf]
    %v1091 = vld [vmem:[#allocation10 + $0x38] sm:$0xf]
    %v1092 = vld [vmem:[#allocation10 + $0x3c] sm:$0xf]
    %v1093 = vld [vmem:[%s8] sm:$0x1]
    %v1095 = vlaneseq
    %v1096 = vshrl.u32 %v1095, 7
    %v1097 = vsub.s32 0, %v1096
    %v1098 = vrot.slane %v1093, %v1097
    %v1116 = vunpack.c.l.b16 %v1077
    %v1117 = vunpack.c.l.b16 %v1078
    %v1118 = vunpack.c.l.b16 %v1079
    %v1119 = vunpack.c.l.b16 %v1080
    %v1120 = vunpack.c.l.b16 %v1081
    %v1121 = vunpack.c.l.b16 %v1082
    %v1122 = vunpack.c.l.b16 %v1083
    %v1123 = vunpack.c.l.b16 %v1084
    %v1124 = vunpack.c.l.b16 %v1085
    %v1125 = vunpack.c.l.b16 %v1086
    %v1126 = vunpack.c.l.b16 %v1087
    %v1127 = vunpack.c.l.b16 %v1088
    %v1128 = vunpack.c.l.b16 %v1089
    %v1129 = vunpack.c.l.b16 %v1090
    %v1130 = vunpack.c.l.b16 %v1091
    %v1131 = vunpack.c.l.b16 %v1092
    %v1132 = vpack.c.b16 %v1117, %v1116
    %v1133 = vpack.c.b16 %v1119, %v1118
    %v1134 = vpack.c.b16 %v1121, %v1120
    %v1135 = vpack.c.b16 %v1123, %v1122
    %v1136 = vpack.c.b16 %v1125, %v1124
    %v1137 = vpack.c.b16 %v1127, %v1126
    %v1138 = vpack.c.b16 %v1129, %v1128
    %v1139 = vpack.c.b16 %v1131, %v1130
    %1148 = vmatprep.subr.bf16.mxu0 0
    %1149 = vmatpush1.bf16.msra.mxu0 %v1132
    %1150 = vmatprep.subr.bf16.mxu0 0
    %1151 = vmatpush1.bf16.msra.mxu0 %v1133
    %1152 = vmatprep.subr.bf16.mxu0 0
    %1153 = vmatpush1.bf16.msra.mxu0 %v1134
    %1154 = vmatprep.subr.bf16.mxu0 0
    %1155 = vmatpush1.bf16.msra.mxu0 %v1135
    %1156 = vmatprep.subr.bf16.mxu0 0
    %1157 = vmatpush1.bf16.msra.mxu0 %v1136
    %1158 = vmatprep.subr.bf16.mxu0 0
    %1159 = vmatpush1.bf16.msra.mxu0 %v1137
    %1160 = vmatprep.subr.bf16.mxu0 0
    %1161 = vmatpush1.bf16.msra.mxu0 %v1138
    %1162 = vmatprep.subr.bf16.mxu0 0
    %1163 = vmatpush1.bf16.msra.mxu0 %v1139
    %1164 = vmatprep.subr.bf16.mxu0 0
    %1165 = vmatpush1.bf16.msra.mxu0 0
    %1166 = vmatprep.subr.bf16.mxu0 0
    %1167 = vmatpush1.bf16.msra.mxu0 0
    %1168 = vmatprep.subr.bf16.mxu0 0
    %1169 = vmatpush1.bf16.msra.mxu0 0
    %1170 = vmatprep.subr.bf16.mxu0 0
    %1171 = vmatpush1.bf16.msra.mxu0 0
    %1172 = vmatprep.subr.bf16.mxu0 0
    %1173 = vmatpush1.bf16.msra.mxu0 0
    %1174 = vmatprep.subr.bf16.mxu0 0
    %1175 = vmatpush1.bf16.msra.mxu0 0
    %1176 = vmatprep.subr.bf16.mxu0 0
    %1177 = vmatpush1.bf16.msra.mxu0 0
    %1178 = vmatprep.subr.bf16.mxu0 0
    %1179 = vmatpush1.bf16.msra.mxu0 0
    %1180 = vmatprep.mubr.bf16.mxu0 0
    %1181 = vmatmul.mubr.bf16.gmra.mrb[0].mxu0 %v1074
    %v1182 = vpop.f32.mrb[0].mxu0
    %v1183 = vadd.f32 %v1098, %v1182
    %v1184 = vpop.f32.mrb[0].mxu0
    %v1185 = vpop.f32.mrb[0].mxu0
    %v1186 = vadd.f32 %v1098, %v1185
    %v1187 = vpop.f32.mrb[0].mxu0
    %1188 = vdwg.mxu0
    %1189 = vst [vmem:[#allocation11] sm:$0xff] %v1183
    %1190 = vst [vmem:[#allocation11 + $0x8] sm:$0xff] %v1186
    // Predicated region
    $region58: #{tpu_custom_call.1} parent=1 // pred_check
      _
    $region59: #{tpu_custom_call.1} parent=1 // pred_check_branch
      %1192 = sbr.rel (0) target = $region61
    $region60: #{tpu_custom_call.1} parent=1 // pred_region
      %s1194 = ssub.s32 256, 256
      %1195 = vsyncadd [#allocation4], %s1194
      %s1196 = sshll.u32 [#allocation11], 4
      %s1197 = int_to_ptr.vmem [resolvable:$true] %s1196
      %1202 = dma.vmem_to_hbm [thread:$0]  %s1197, 256, %s9, [#allocation4], 128, 128, 8
    $region61: #{tpu_custom_call.1} parent=1 // pred_fallthru
      _
    // Predicated region
    $region62: #{tpu_custom_call.1} parent=1 // pred_check
      _
    $region63: #{tpu_custom_call.1} parent=1 // pred_check_branch
      %1204 = sbr.rel (0) target = $region65
    $region64: #{tpu_custom_call.1} parent=1 // pred_region
      %s1206 = ssub.s32 256, 256
      %1207 = vsyncadd [#allocation13], %s1206
      %s1208 = sshll.u32 [#allocation12], 4
      %s1209 = int_to_ptr.vmem [resolvable:$true] %s1208
      %1214 = dma.vmem_to_hbm [thread:$0]  %s1209, 256, %s10, [#allocation13], 128, 128, 8
    $region65: #{tpu_custom_call.1} parent=1 // pred_fallthru
      _
    // Predicated region
    $region66: #{tpu_custom_call.1} parent=1 // pred_check
      _
    $region67: #{tpu_custom_call.1} parent=1 // pred_check_branch
      %1216 = sbr.rel (0) target = $region69
    $region68: #{tpu_custom_call.1} parent=1 // pred_region
      %1217 = dma.done [#allocation4], 256
    $region69: #{tpu_custom_call.1} parent=1 // pred_fallthru
      _
    // Predicated region
    $region70: #{tpu_custom_call.1} parent=1 // pred_check
      _
    $region71: #{tpu_custom_call.1} parent=1 // pred_check_branch
      %1219 = sbr.rel (0) target = $region73
    $region72: #{tpu_custom_call.1} parent=1 // pred_region
      %1220 = dma.done [#allocation13], 256
    $region73: #{tpu_custom_call.1} parent=1 // pred_fallthru
      _
    %1221 = vsyncpa [#allocation3], 1
    %1222 = vsyncpa [#allocation6], 1
    %1223 = vsyncpa [#allocation9], 1
    %1224 = vsyncpa [#allocation4], 1
    %1225 = vsyncpa [#allocation13], 1

</llo_original>
